<compile_context>
chip_gen: v7x
topology: tpu7x:2x2x1
jax: 0.10.0
libtpu: 0.0.40
codegen_flags: <defaults>
</compile_context>

<pallas_src>
import jax
import jax.numpy as jnp
from jax.experimental import pallas as pl
from jax.experimental.pallas import tpu as pltpu


def _my_list_dense_kernel(w_ref, xt_ref, o_ref):
    """Lane-dense weighted sum on the VPU.

    w_ref  : SMEM (4,) f32     -- folded weights W0 @ W1 @ W2 @ W3 (column).
    xt_ref : VMEM (4, TILE_B)  -- x transposed; batch on the 128-lane axis.
    o_ref  : VMEM (1, TILE_B)  -- lane-dense output tile.
    """
    xt = xt_ref[...]                       # (4, TILE_B) f32
    acc = xt[0:1, :] * w_ref[0]            # scalar-broadcast mul on the VPU
    acc = acc + xt[1:2, :] * w_ref[1]
    acc = acc + xt[2:3, :] * w_ref[2]
    acc = acc + xt[3:4, :] * w_ref[3]
    o_ref[...] = acc.astype(o_ref.dtype)   # (1, TILE_B), unmasked lane-dense store


def my_list_dense(x, params, *, tile_b=512):
    """params = [W0 (4,4), W1 (4,4), W2 (4,4), W3 (4,1)]; x: (B, 4) -> (B, 1)."""
    w0, w1, w2, w3 = params
    x = x.astype(jnp.float32)

    # Fold the chain once (wrapper side, negligible 4x4x4 work). This replaces
    # three of the four batch-scaled matmuls entirely.
    w_eff = jnp.dot(jnp.dot(jnp.dot(w0, w1), w2), w3)   # (4, 1)
    w_vec = w_eff[:, 0].astype(jnp.float32)             # (4,)

    batch = x.shape[0]
    num_tiles = pl.cdiv(batch, tile_b)
    b_pad = num_tiles * tile_b

    # Layout plumbing: batch onto the lane axis, zero-padded to a tile multiple.
    xt = jnp.zeros((4, b_pad), jnp.float32).at[:, :batch].set(x.T)

    out_t = pl.pallas_call(
        _my_list_dense_kernel,
        out_shape=jax.ShapeDtypeStruct((1, b_pad), jnp.float32),
        grid=(num_tiles,),
        in_specs=[
            # Folded weights: 4 scalars, resident in SMEM for every grid step.
            pl.BlockSpec(memory_space=pltpu.MemorySpace.SMEM),
            # x^T tiled along the lane (batch) axis; auto double-buffered.
            pl.BlockSpec((4, tile_b), lambda i: (0, i)),
        ],
        out_specs=pl.BlockSpec((1, tile_b), lambda i: (0, i)),
        compiler_params=pltpu.CompilerParams(
            dimension_semantics=("parallel",),
        ),
    )(w_vec, xt)

    return out_t[0, :batch].reshape(batch, 1)


def init_params(key):
    """Deterministic stand-in for nn.ParameterList of torch.randn tensors."""
    k0, k1, k2, k3 = jax.random.split(key, 4)
    return [
        jax.random.normal(k0, (4, 4), dtype=jnp.float32),
        jax.random.normal(k1, (4, 4), dtype=jnp.float32),
        jax.random.normal(k2, (4, 4), dtype=jnp.float32),
        jax.random.normal(k3, (4, 1), dtype=jnp.float32),
    ]


def _reference(x, params):
    ref = x
    for w in params:
        ref = jnp.dot(ref, w)
    return ref


if __name__ == "__main__":
    key = jax.random.PRNGKey(0)
    pkey, xkey, xkey2 = jax.random.split(key, 3)

    params = init_params(pkey)

    # Small batch consistent with the original module (it uses (1, 4)).
    x = jax.random.normal(xkey, (2, 4), dtype=jnp.float32)
    out = jax.block_until_ready(my_list_dense(x, params))
    ref = _reference(x, params)
    assert out.shape == (2, 1)
    assert jnp.allclose(out, ref, atol=1e-4, rtol=1e-4)

    # Larger, non-multiple-of-tile batch to exercise the grid + padding path.
    x_big = jax.random.normal(xkey2, (1031, 4), dtype=jnp.float32)
    out_big = jax.block_until_ready(my_list_dense(x_big, params))
    ref_big = _reference(x_big, params)
    assert out_big.shape == (1031, 1)
    assert jnp.allclose(out_big, ref_big, atol=1e-4, rtol=1e-4)

    print("KERNEL_OK")
</pallas_src>

<mosaic_0001>
module attributes {stable_mosaic.version = 11 : i64} {
  func.func @_my_list_dense_kernel(%arg0: i32, %arg1: memref<4xf32, #tpu.memory_space<smem>>, %arg2: memref<4x512xf32, #tpu.memory_space<vmem>>, %arg3: memref<1x512xf32, #tpu.memory_space<vmem>>) attributes {dimension_semantics = [#tpu.dimension_semantics<parallel>], iteration_bounds = array<i64: 1>, scalar_prefetch = 0 : i64, scratch_operands = 0 : i64, tpu.core_type = #tpu.core_type<tc>, window_params = [{transform_indices = @transform_0, window_bounds = array<i64: 4>}, {transform_indices = @transform_1, window_bounds = array<i64: 4, 512>}, {transform_indices = @transform_2, window_bounds = array<i64: 1, 512>}]} {
    %c0 = arith.constant 0 : index
    %c0_0 = arith.constant 0 : index
    %0 = vector.load %arg2[%c0, %c0_0] : memref<4x512xf32, #tpu.memory_space<vmem>>, vector<4x512xf32>
    %1 = vector.extract_strided_slice %0 {offsets = [0, 0], sizes = [1, 512], strides = [1, 1]} : vector<4x512xf32> to vector<1x512xf32>
    %c0_1 = arith.constant 0 : index
    %2 = memref.load %arg1[%c0_1] : memref<4xf32, #tpu.memory_space<smem>>
    %3 = vector.broadcast %2 : f32 to vector<1x512xf32>
    %4 = arith.mulf %1, %3 : vector<1x512xf32>
    %5 = vector.extract_strided_slice %0 {offsets = [1, 0], sizes = [1, 512], strides = [1, 1]} : vector<4x512xf32> to vector<1x512xf32>
    %c1 = arith.constant 1 : index
    %6 = memref.load %arg1[%c1] : memref<4xf32, #tpu.memory_space<smem>>
    %7 = vector.broadcast %6 : f32 to vector<1x512xf32>
    %8 = arith.mulf %5, %7 : vector<1x512xf32>
    %9 = arith.addf %4, %8 : vector<1x512xf32>
    %10 = vector.extract_strided_slice %0 {offsets = [2, 0], sizes = [1, 512], strides = [1, 1]} : vector<4x512xf32> to vector<1x512xf32>
    %c2 = arith.constant 2 : index
    %11 = memref.load %arg1[%c2] : memref<4xf32, #tpu.memory_space<smem>>
    %12 = vector.broadcast %11 : f32 to vector<1x512xf32>
    %13 = arith.mulf %10, %12 : vector<1x512xf32>
    %14 = arith.addf %9, %13 : vector<1x512xf32>
    %15 = vector.extract_strided_slice %0 {offsets = [3, 0], sizes = [1, 512], strides = [1, 1]} : vector<4x512xf32> to vector<1x512xf32>
    %c3 = arith.constant 3 : index
    %16 = memref.load %arg1[%c3] : memref<4xf32, #tpu.memory_space<smem>>
    %17 = vector.broadcast %16 : f32 to vector<1x512xf32>
    %18 = arith.mulf %15, %17 : vector<1x512xf32>
    %19 = arith.addf %14, %18 : vector<1x512xf32>
    %c0_2 = arith.constant 0 : index
    %c0_3 = arith.constant 0 : index
    %20 = vector.load %arg3[%c0_2, %c0_3] : memref<1x512xf32, #tpu.memory_space<vmem>>, vector<1x512xf32>
    tpu.vector_store %arg3[%c0_2, %c0_3], %19 {strides = array<i32>} : memref<1x512xf32, #tpu.memory_space<vmem>>, vector<1x512xf32>,
    return
  }
  func.func @transform_0(%arg0: i32) -> i32 {
    %c0_i32 = arith.constant 0 : i32
    %c0_i32_0 = arith.constant 0 : i32
    return %c0_i32 : i32
  }
  func.func @transform_1(%arg0: i32) -> (i32, i32) {
    %c0_i32 = arith.constant 0 : i32
    %c0_i32_0 = arith.constant 0 : i32
    return %c0_i32, %arg0 : i32, i32
  }
  func.func @transform_2(%arg0: i32) -> (i32, i32) {
    %c0_i32 = arith.constant 0 : i32
    %c0_i32_0 = arith.constant 0 : i32
    return %c0_i32, %arg0 : i32, i32
  }
}

</mosaic_0001>

<llo_original>
// kernel: tpu_custom_call.1
$region0: #{tpu_custom_call.1}
  #allocation0 [shape = 'u32[]', space=smem, size = 0x4, offset = 0x4, fixed_abs, tag = 'smem constant byte address 0x4 - core index']
  #allocation1 [shape = 'u32[144,128]{1,0:T(1,128)}', space=vmem, size = 0x12000, scoped, tag = 'internal scratch']
  %s0 = inlined_call_operand.hbm [shape: f32[4], index: 0, kind: input, shape index: {}]
  %s1 = inlined_call_operand.hbm [shape: f32[4,512], index: 1, kind: input, shape index: {}]
  %s2 = inlined_call_operand.hbm [shape: f32[1,512], index: 2, kind: output, shape index: {}]
  %s3 = sld [smem:[#allocation0]]
  $region26: #{tpu_custom_call.1} parent=0
    _
  %s5 = ssub.s32 1, %s3
  %s6 = scalar_select 0, %s5, %s3
  $region1: #{tpu_custom_call.1} parent=0
    #allocation2 [shape = 'u8[512]{0}', space=smem, size = 0x200, scoped, tag = 'input window, operand 0, single buffered']
    #allocation3 [shape = 's32[1]{0}', space=sflag, size = 0x4, scoped, tag = 'scoped memory for tpu_custom_call.1']
    #allocation4 [shape = 's32[1]{0}', space=sflag, size = 0x4, scoped, tag = 'scoped memory for tpu_custom_call.1']
    #allocation5 [shape = 's32[1]{0}', space=sflag, size = 0x4, scoped, tag = 'scoped memory for tpu_custom_call.1']
    #allocation6 [shape = 'u8[8192]{0}', space=vmem, size = 0x2000, scoped, tag = 'input window, operand 1, single buffered']
    #allocation7 [shape = 'u8[2048]{0}', space=vmem, size = 0x800, scoped, tag = 'output window, operand 0, single buffered']
    %7 = vsyncpa [#allocation5], 0
    %8 = vsyncpa [#allocation3], 0
    %9 = vsyncpa [#allocation4], 0
    // Predicated region
    $region2: #{tpu_custom_call.1} parent=1 // pred_check
      _
    $region3: #{tpu_custom_call.1} parent=1 // pred_check_branch
      %11 = sbr.rel (0) target = $region5
    $region4: #{tpu_custom_call.1} parent=1 // pred_region
      %s13 = ssub.s32 16, 16
      %14 = vsyncadd [#allocation5], %s13
      %17 = dma.hbm_to_smem %s0, 16, [#allocation2], [#allocation5]
    $region5: #{tpu_custom_call.1} parent=1 // pred_fallthru
      _
    // Predicated region
    $region6: #{tpu_custom_call.1} parent=1 // pred_check
      _
    $region7: #{tpu_custom_call.1} parent=1 // pred_check_branch
      %19 = sbr.rel (0) target = $region9
    $region8: #{tpu_custom_call.1} parent=1 // pred_region
      %s21 = ssub.s32 256, 256
      %22 = vsyncadd [#allocation3], %s21
      %s24 = sshll.u32 [#allocation6], 4
      %s25 = int_to_ptr.vmem [resolvable:$true] %s24
      %27 = dma.hbm_to_vmem [thread:$0]  %s1, 256, %s25, [#allocation3]
    $region9: #{tpu_custom_call.1} parent=1 // pred_fallthru
      _
    // Predicated region
    $region10: #{tpu_custom_call.1} parent=1 // pred_check
      _
    $region11: #{tpu_custom_call.1} parent=1 // pred_check_branch
      %29 = sbr.rel (0) target = $region13
    $region12: #{tpu_custom_call.1} parent=1 // pred_region
      %30 = dma.done [#allocation5], 16
    $region13: #{tpu_custom_call.1} parent=1 // pred_fallthru
      _
    // Predicated region
    $region14: #{tpu_custom_call.1} parent=1 // pred_check
      _
    $region15: #{tpu_custom_call.1} parent=1 // pred_check_branch
      %32 = sbr.rel (0) target = $region17
    $region16: #{tpu_custom_call.1} parent=1 // pred_region
      %33 = dma.done [#allocation3], 256
    $region17: #{tpu_custom_call.1} parent=1 // pred_fallthru
      _
    %34 = sfence
    %v35 = vld [vmem:[#allocation6] sm:$0xff]
    %v36 = vld [vmem:[#allocation6 + $0x8] sm:$0xff]
    %s37 = sld [smem:[#allocation2]]
    %v38 = vstv %s37
    %v39 = vmul.f32 %v35, %v38
    %v40 = vmul.f32 %v36, %v38
    %s41 = sld [smem:[#allocation2 + $0x1]]
    %v42 = vstv %s41
    %v43 = vmul.f32 %v35, %v42
    %v44 = vmul.f32 %v36, %v42
    %v47 = vrot.slane %v43, 5
    %v48 = vrot.slane %v47, 4
    %v49 = vrot.slane %v44, 5
    %v50 = vrot.slane %v49, 4
    %v53 = vadd.f32 %v39, %v48
    %v54 = vadd.f32 %v40, %v50
    %s55 = sld [smem:[#allocation2 + $0x2]]
    %v56 = vstv %s55
    %v57 = vmul.f32 %v35, %v56
    %v58 = vmul.f32 %v36, %v56
    %v61 = vrot.slane %v57, 6
    %v62 = vrot.slane %v61, 4
    %v63 = vrot.slane %v58, 6
    %v64 = vrot.slane %v63, 4
    %v67 = vadd.f32 %v53, %v62
    %v68 = vadd.f32 %v54, %v64
    %s69 = sld [smem:[#allocation2 + $0x3]]
    %v70 = vstv %s69
    %v71 = vmul.f32 %v35, %v70
    %v72 = vmul.f32 %v36, %v70
    %v75 = vrot.slane %v71, 7
    %v76 = vrot.slane %v75, 4
    %v77 = vrot.slane %v72, 7
    %v78 = vrot.slane %v77, 4
    %v81 = vadd.f32 %v67, %v76
    %v82 = vadd.f32 %v68, %v78
    %v86 = vunpack.c.l.s4 1966171168
    %v87 = vunpack.c.0.s8 %v86
    %v88 = vlaneseq
    %v89 = vshrl.u32 %v88, 7
    %v90 = vsub.s32 %v87, %v89
    %v91 = vrot.slane %v81, %v90
    %v93 = vunpack.c.l.s4 1966171168
    %v94 = vunpack.c.0.s8 %v93
    %v95 = vlaneseq
    %v96 = vshrl.u32 %v95, 7
    %v97 = vsub.s32 %v94, %v96
    %v98 = vrot.slane %v82, %v97
    %v99 = vcombine.low %v91, %v98
    %v101 = vunpack.c.l.s4 1966171168
    %v102 = vunpack.c.0.s8 %v101
    %v103 = vlaneseq
    %v104 = vshrl.u32 %v103, 7
    %v105 = vsub.s32 %v102, %v104
    %v106 = vrot.slane %v99, %v105
    %v108 = vlaneseq
    %vm109 = vcmp.ge.s32.totalorder %v108, 0
    %vm110 = vcmp.lt.s32.totalorder %v108, 512
    %vm111 = vmand %vm109, %vm110
    %112 = vst.msk [vmem:[#allocation7] sm:$0xf] %vm111, %v106
    // Predicated region
    $region18: #{tpu_custom_call.1} parent=1 // pred_check
      _
    $region19: #{tpu_custom_call.1} parent=1 // pred_check_branch
      %114 = sbr.rel (0) target = $region21
    $region20: #{tpu_custom_call.1} parent=1 // pred_region
      %s116 = ssub.s32 64, 64
      %117 = vsyncadd [#allocation4], %s116
      %s119 = sshll.u32 [#allocation7], 4
      %s120 = int_to_ptr.vmem [resolvable:$true] %s119
      %122 = dma.vmem_to_hbm [thread:$0]  %s120, 64, %s2, [#allocation4]
    $region21: #{tpu_custom_call.1} parent=1 // pred_fallthru
      _
    // Predicated region
    $region22: #{tpu_custom_call.1} parent=1 // pred_check
      _
    $region23: #{tpu_custom_call.1} parent=1 // pred_check_branch
      %124 = sbr.rel (0) target = $region25
    $region24: #{tpu_custom_call.1} parent=1 // pred_region
      %125 = dma.done [#allocation4], 64
    $region25: #{tpu_custom_call.1} parent=1 // pred_fallthru
      _
    %126 = vsyncpa [#allocation3], 1
    %127 = vsyncpa [#allocation4], 1
    %128 = vsyncpa [#allocation5], 1

</llo_original>
